<compile_context>
chip_gen: v6e
topology: v6e:2x2x1
jax: 0.10.0
libtpu: 0.0.40
codegen_flags: <defaults>
</compile_context>

<pallas_src>
import numpy as np
import jax
import jax.numpy as jnp
from jax.experimental import pallas as pl
from jax.experimental.pallas import tpu as pltpu

LN_EPS = 1e-5  # PyTorch nn.LayerNorm default eps


# ---------------------------------------------------------------------------
# Module config helpers (mirror Embeddings1D.__init__ logic)
# ---------------------------------------------------------------------------
def get_stack_num(input_len, target_seq_len, embed_dim):
    if embed_dim == 768:
        for i in range(1, input_len + 1):
            if input_len % i == 0 and input_len // i <= target_seq_len:
                return i
    else:
        for i in range(1, input_len + 1):
            root = np.sqrt(input_len // i)
            if (input_len % i == 0 and input_len // i <= target_seq_len
                    and int(root + 0.5) ** 2 == input_len // i):
                return i
    return input_len


# ---------------------------------------------------------------------------
# Pallas kernel: patch-matmul + bias + LayerNorm + positional-embedding add
# ---------------------------------------------------------------------------
def _embeddings1d_kernel(xp_ref, w_ref, b_ref, g_ref, beta_ref, pos_ref, o_ref):
    # xp_ref : (TS, C*K)  patch rows for one (batch, seq-tile) grid point
    # w_ref  : (C*K, E)   flattened conv weight (transposed), grid-resident
    # b_ref  : (1, E)     conv bias
    # g_ref  : (1, E)     LayerNorm gamma
    # beta_ref: (1, E)    LayerNorm beta
    # pos_ref: (TS, E)    position embeddings for this seq tile (shared over b)
    y = jnp.dot(xp_ref[...], w_ref[...], preferred_element_type=jnp.float32)
    y = y + b_ref[...]
    # Single-pass LayerNorm statistics: var = E[y^2] - mean^2
    mean = jnp.mean(y, axis=-1, keepdims=True)
    meansq = jnp.mean(y * y, axis=-1, keepdims=True)
    var = meansq - mean * mean
    inv = jax.lax.rsqrt(var + LN_EPS)
    o_ref[...] = (y - mean) * inv * g_ref[...] + beta_ref[...] + pos_ref[...]


def _choose_seq_tile(seq, max_tile=512):
    """Pick a sublane-aligned seq tile and the padded seq length it divides."""
    seq_pad8 = -(-seq // 8) * 8           # round up to multiple of 8 (sublane)
    if seq_pad8 <= max_tile:
        return seq_pad8, seq_pad8         # one tile covers the whole (padded) seq
    ts = max_tile                          # 512: multiple of 8, fits VMEM easily
    seq_pad = -(-seq // ts) * ts
    return ts, seq_pad


def embeddings1d_forward(x, params, *, embed_dim, target_seq_len, padding_idx=1):
    """x: (b, c, l) float32, NCL like PyTorch Conv1d input."""
    b, c, l = x.shape
    stack_num = get_stack_num(l, target_seq_len, embed_dim)
    seq = l // stack_num
    patched_dimensions = (int(np.sqrt(seq)), int(np.sqrt(seq)))
    ck = c * stack_num

    # position ids are padding_idx+1 ... seq+padding_idx -> must fit the table
    if seq + padding_idx >= target_seq_len:
        raise ValueError(
            f"position table too small: need index {seq + padding_idx} but "
            f"table has {target_seq_len} rows")

    # --- glue: patchify (equivalent to Conv1d with kernel=stride=stack_num) ---
    # (b, c, l) -> (b, c, seq, k) -> (b, seq, c, k) -> (b, seq, c*k)
    xp = x.reshape(b, c, seq, stack_num).transpose(0, 2, 1, 3).reshape(b, seq, ck)

    # flatten conv weight (E, c, k) -> (c*k, E)
    w_flat = params["conv_w"].reshape(embed_dim, ck).T
    bias = params["conv_b"].reshape(1, embed_dim)
    gamma = params["ln_gamma"].reshape(1, embed_dim)
    beta = params["ln_beta"].reshape(1, embed_dim)

    # Contiguous position ids -> static slice (no gather), shared across batch.
    pos = jax.lax.slice_in_dim(params["pos_table"],
                               padding_idx + 1, padding_idx + 1 + seq, axis=0)

    # --- tiling: large seq tiles, remainder handled by zero-padding ---
    ts, seq_pad = _choose_seq_tile(seq)
    if seq_pad != seq:
        xp = jnp.pad(xp, ((0, 0), (0, seq_pad - seq), (0, 0)))
        pos = jnp.pad(pos, ((0, seq_pad - seq), (0, 0)))

    grid = (b, seq_pad // ts)

    out = pl.pallas_call(
        _embeddings1d_kernel,
        out_shape=jax.ShapeDtypeStruct((b, seq_pad, embed_dim), jnp.float32),
        grid_spec=pltpu.PrefetchScalarGridSpec(
            num_scalar_prefetch=0,
            grid=grid,
            in_specs=[
                # patch rows: batch dim squeezed -> kernel sees (TS, ck)
                pl.BlockSpec((None, ts, ck), lambda bi, si: (bi, si, 0)),
                # weight / bias / gamma / beta: grid-invariant (stay resident)
                pl.BlockSpec((ck, embed_dim), lambda bi, si: (0, 0)),
                pl.BlockSpec((1, embed_dim), lambda bi, si: (0, 0)),
                pl.BlockSpec((1, embed_dim), lambda bi, si: (0, 0)),
                pl.BlockSpec((1, embed_dim), lambda bi, si: (0, 0)),
                # pos embeds: indexed only by the seq-tile axis (no b x dup)
                pl.BlockSpec((ts, embed_dim), lambda bi, si: (si, 0)),
            ],
            out_specs=pl.BlockSpec((None, ts, embed_dim),
                                   lambda bi, si: (bi, si, 0)),
        ),
        compiler_params=pltpu.CompilerParams(
            dimension_semantics=("parallel", "parallel"),
            vmem_limit_bytes=64 * 1024 * 1024,
        ),
    )(xp, w_flat, bias, gamma, beta, pos)

    out = out[:, :seq, :]
    if embed_dim == 768:
        return out
    return out, patched_dimensions


# ---------------------------------------------------------------------------
# Deterministic parameter construction (shapes from Embeddings1D.__init__)
# ---------------------------------------------------------------------------
def init_params(key, *, in_channels, embed_dim, target_seq_len, stack_num, padding_idx=1):
    k1, k2, k3 = jax.random.split(key, 3)
    conv_w = 0.02 * jax.random.normal(k1, (embed_dim, in_channels, stack_num), jnp.float32)
    conv_b = 0.02 * jax.random.normal(k2, (embed_dim,), jnp.float32)
    pos_table = 0.02 * jax.random.normal(k3, (target_seq_len, embed_dim), jnp.float32)
    # nn.Embedding(padding_idx=1) zeroes that row at init
    pos_table = pos_table.at[padding_idx].set(0.0)
    ln_gamma = jnp.ones((embed_dim,), jnp.float32)
    ln_beta = jnp.zeros((embed_dim,), jnp.float32)
    return dict(conv_w=conv_w, conv_b=conv_b, pos_table=pos_table,
                ln_gamma=ln_gamma, ln_beta=ln_beta)


def _reference_forward(x, params, *, embed_dim, target_seq_len, padding_idx=1):
    """Pure-JAX reference for a sanity check."""
    b, c, l = x.shape
    stack_num = get_stack_num(l, target_seq_len, embed_dim)
    seq = l // stack_num
    xp = x.reshape(b, c, seq, stack_num).transpose(0, 2, 1, 3).reshape(b, seq, c * stack_num)
    w_flat = params["conv_w"].reshape(embed_dim, c * stack_num).T
    y = jnp.einsum("bsk,ke->bse", xp, w_flat) + params["conv_b"]
    mean = jnp.mean(y, axis=-1, keepdims=True)
    var = jnp.mean((y - mean) ** 2, axis=-1, keepdims=True)
    yn = (y - mean) / jnp.sqrt(var + LN_EPS)
    yn = yn * params["ln_gamma"] + params["ln_beta"]
    pos_ids = padding_idx + 1 + jnp.arange(seq)
    return yn + params["pos_table"][pos_ids][None]


if __name__ == "__main__":
    key = jax.random.PRNGKey(0)

    # --- Case 1: embed_dim != 768 path (returns (out, patched_dimensions)) ---
    #   (b, c, l) = (2, 4, 64), embed_dim=256, target_seq_len=32
    #   -> stack_num=4, seq=16 (=4^2), patched_dimensions=(4, 4)
    b, c, l = 2, 4, 64
    embed_dim = 256
    target_seq_len = 32
    stack_num = get_stack_num(l, target_seq_len, embed_dim)
    kx, kp, key = jax.random.split(key, 3)
    x = jax.random.normal(kx, (b, c, l), jnp.float32)
    params = init_params(kp, in_channels=c, embed_dim=embed_dim,
                         target_seq_len=target_seq_len, stack_num=stack_num)

    out, patched_dims = embeddings1d_forward(
        x, params, embed_dim=embed_dim, target_seq_len=target_seq_len)
    out = jax.block_until_ready(out)

    ref = _reference_forward(x, params, embed_dim=embed_dim, target_seq_len=target_seq_len)
    np.testing.assert_allclose(np.asarray(out), np.asarray(ref), rtol=1e-4, atol=1e-5)
    assert out.shape == (b, l // stack_num, embed_dim)
    assert patched_dims == (4, 4)

    # --- Case 2: embed_dim == 768 path with a seq that needs remainder padding
    #   (b, c, l) = (2, 3, 20), embed_dim=768, target_seq_len=32
    #   -> stack_num=1, seq=20 (not a multiple of 8 -> padded tile path)
    b2, c2, l2 = 2, 3, 20
    embed_dim2 = 768
    target_seq_len2 = 32
    stack_num2 = get_stack_num(l2, target_seq_len2, embed_dim2)
    kx2, kp2 = jax.random.split(key)
    x2 = jax.random.normal(kx2, (b2, c2, l2), jnp.float32)
    params2 = init_params(kp2, in_channels=c2, embed_dim=embed_dim2,
                          target_seq_len=target_seq_len2, stack_num=stack_num2)

    out2 = embeddings1d_forward(
        x2, params2, embed_dim=embed_dim2, target_seq_len=target_seq_len2)
    out2 = jax.block_until_ready(out2)

    ref2 = _reference_forward(x2, params2, embed_dim=embed_dim2,
                              target_seq_len=target_seq_len2)
    np.testing.assert_allclose(np.asarray(out2), np.asarray(ref2), rtol=1e-4, atol=1e-5)
    assert out2.shape == (b2, l2 // stack_num2, embed_dim2)

    print("KERNEL_OK")
</pallas_src>

<mosaic_0001>
module attributes {stable_mosaic.version = 11 : i64} {
  func.func @_embeddings1d_kernel(%arg0: i32, %arg1: i32, %arg2: memref<1x16x16xf32, #tpu.memory_space<vmem>>, %arg3: memref<16x256xf32, #tpu.memory_space<vmem>>, %arg4: memref<1x256xf32, #tpu.memory_space<vmem>>, %arg5: memref<1x256xf32, #tpu.memory_space<vmem>>, %arg6: memref<1x256xf32, #tpu.memory_space<vmem>>, %arg7: memref<16x256xf32, #tpu.memory_space<vmem>>, %arg8: memref<1x16x256xf32, #tpu.memory_space<vmem>>) attributes {dimension_semantics = [#tpu.dimension_semantics<parallel>, #tpu.dimension_semantics<parallel>], iteration_bounds = array<i64: 2, 1>, scalar_prefetch = 0 : i64, scratch_operands = 0 : i64, tpu.core_type = #tpu.core_type<tc>, window_params = [{transform_indices = @transform_0, window_bounds = array<i64: 1, 16, 16>}, {pipeline_mode = #tpu.pipeline_mode<synchronous>, transform_indices = @transform_1, window_bounds = array<i64: 16, 256>}, {pipeline_mode = #tpu.pipeline_mode<synchronous>, transform_indices = @transform_2, window_bounds = array<i64: 1, 256>}, {pipeline_mode = #tpu.pipeline_mode<synchronous>, transform_indices = @transform_3, window_bounds = array<i64: 1, 256>}, {pipeline_mode = #tpu.pipeline_mode<synchronous>, transform_indices = @transform_4, window_bounds = array<i64: 1, 256>}, {transform_indices = @transform_5, window_bounds = array<i64: 16, 256>}, {transform_indices = @transform_6, window_bounds = array<i64: 1, 16, 256>}]} {
    %c0 = arith.constant 0 : index
    %c0_0 = arith.constant 0 : index
    %c0_1 = arith.constant 0 : index
    %0 = vector.load %arg2[%c0, %c0_0, %c0_1] : memref<1x16x16xf32, #tpu.memory_space<vmem>>, vector<1x16x16xf32>
    %1 = vector.shape_cast %0 : vector<1x16x16xf32> to vector<16x16xf32>
    %c0_2 = arith.constant 0 : index
    %c0_3 = arith.constant 0 : index
    %2 = vector.load %arg3[%c0_2, %c0_3] : memref<16x256xf32, #tpu.memory_space<vmem>>, vector<16x256xf32>
    %cst = arith.constant dense<0.000000e+00> : vector<16x256xf32>
    %3 = tpu.matmul %1, %2, %cst {dimension_numbers = #tpu.dot_dimension_numbers<[1], [0], [0], [1], [0, 0, 1, 1], [], []>} : vector<16x16xf32>, vector<16x256xf32>, vector<16x256xf32> -> vector<16x256xf32>
    %c0_4 = arith.constant 0 : index
    %c0_5 = arith.constant 0 : index
    %4 = vector.load %arg4[%c0_4, %c0_5] : memref<1x256xf32, #tpu.memory_space<vmem>>, vector<1x256xf32>
    %5 = vector.broadcast %4 : vector<1x256xf32> to vector<16x256xf32>
    %6 = arith.addf %3, %5 : vector<16x256xf32>
    %cst_6 = arith.constant dense<0.000000e+00> : vector<16xf32>
    %7 = vector.multi_reduction <add>, %6, %cst_6 [1] : vector<16x256xf32> to vector<16xf32>
    %8 = vector.shape_cast %7 : vector<16xf32> to vector<16x1xf32>
    %cst_7 = arith.constant 2.560000e+02 : f32
    %9 = vector.broadcast %cst_7 : f32 to vector<16x1xf32>
    %10 = arith.divf %8, %9 : vector<16x1xf32>
    %11 = arith.mulf %6, %6 : vector<16x256xf32>
    %cst_8 = arith.constant dense<0.000000e+00> : vector<16xf32>
    %12 = vector.multi_reduction <add>, %11, %cst_8 [1] : vector<16x256xf32> to vector<16xf32>
    %13 = vector.shape_cast %12 : vector<16xf32> to vector<16x1xf32>
    %cst_9 = arith.constant 2.560000e+02 : f32
    %14 = vector.broadcast %cst_9 : f32 to vector<16x1xf32>
    %15 = arith.divf %13, %14 : vector<16x1xf32>
    %16 = arith.mulf %10, %10 : vector<16x1xf32>
    %17 = arith.subf %15, %16 : vector<16x1xf32>
    %cst_10 = arith.constant 9.99999974E-6 : f32
    %18 = vector.broadcast %cst_10 : f32 to vector<16x1xf32>
    %19 = arith.addf %17, %18 : vector<16x1xf32>
    %20 = math.rsqrt %19 : vector<16x1xf32>
    %21 = vector.broadcast %10 : vector<16x1xf32> to vector<16x256xf32>
    %22 = arith.subf %6, %21 : vector<16x256xf32>
    %23 = vector.broadcast %20 : vector<16x1xf32> to vector<16x256xf32>
    %24 = arith.mulf %22, %23 : vector<16x256xf32>
    %c0_11 = arith.constant 0 : index
    %c0_12 = arith.constant 0 : index
    %25 = vector.load %arg5[%c0_11, %c0_12] : memref<1x256xf32, #tpu.memory_space<vmem>>, vector<1x256xf32>
    %26 = vector.broadcast %25 : vector<1x256xf32> to vector<16x256xf32>
    %27 = arith.mulf %24, %26 : vector<16x256xf32>
    %c0_13 = arith.constant 0 : index
    %c0_14 = arith.constant 0 : index
    %28 = vector.load %arg6[%c0_13, %c0_14] : memref<1x256xf32, #tpu.memory_space<vmem>>, vector<1x256xf32>
    %29 = vector.broadcast %28 : vector<1x256xf32> to vector<16x256xf32>
    %30 = arith.addf %27, %29 : vector<16x256xf32>
    %c0_15 = arith.constant 0 : index
    %c0_16 = arith.constant 0 : index
    %31 = vector.load %arg7[%c0_15, %c0_16] : memref<16x256xf32, #tpu.memory_space<vmem>>, vector<16x256xf32>
    %32 = arith.addf %30, %31 : vector<16x256xf32>
    %c0_17 = arith.constant 0 : index
    %c0_18 = arith.constant 0 : index
    %c0_19 = arith.constant 0 : index
    %33 = vector.load %arg8[%c0_17, %c0_18, %c0_19] : memref<1x16x256xf32, #tpu.memory_space<vmem>>, vector<1x16x256xf32>
    %34 = vector.shape_cast %33 : vector<1x16x256xf32> to vector<16x256xf32>
    %35 = vector.shape_cast %32 : vector<16x256xf32> to vector<1x16x256xf32>
    tpu.vector_store %arg8[%c0_17, %c0_18, %c0_19], %35 {strides = array<i32>} : memref<1x16x256xf32, #tpu.memory_space<vmem>>, vector<1x16x256xf32>,
    return
  }
  func.func @transform_0(%arg0: i32, %arg1: i32) -> (i32, i32, i32) {
    %c0_i32 = arith.constant 0 : i32
    %c0_i32_0 = arith.constant 0 : i32
    return %arg0, %arg1, %c0_i32 : i32, i32, i32
  }
  func.func @transform_1(%arg0: i32, %arg1: i32) -> (i32, i32) {
    %c0_i32 = arith.constant 0 : i32
    %c0_i32_0 = arith.constant 0 : i32
    %c0_i32_1 = arith.constant 0 : i32
    return %c0_i32, %c0_i32_0 : i32, i32
  }
  func.func @transform_2(%arg0: i32, %arg1: i32) -> (i32, i32) {
    %c0_i32 = arith.constant 0 : i32
    %c0_i32_0 = arith.constant 0 : i32
    %c0_i32_1 = arith.constant 0 : i32
    return %c0_i32, %c0_i32_0 : i32, i32
  }
  func.func @transform_3(%arg0: i32, %arg1: i32) -> (i32, i32) {
    %c0_i32 = arith.constant 0 : i32
    %c0_i32_0 = arith.constant 0 : i32
    %c0_i32_1 = arith.constant 0 : i32
    return %c0_i32, %c0_i32_0 : i32, i32
  }
  func.func @transform_4(%arg0: i32, %arg1: i32) -> (i32, i32) {
    %c0_i32 = arith.constant 0 : i32
    %c0_i32_0 = arith.constant 0 : i32
    %c0_i32_1 = arith.constant 0 : i32
    return %c0_i32, %c0_i32_0 : i32, i32
  }
  func.func @transform_5(%arg0: i32, %arg1: i32) -> (i32, i32) {
    %c0_i32 = arith.constant 0 : i32
    %c0_i32_0 = arith.constant 0 : i32
    return %arg1, %c0_i32 : i32, i32
  }
  func.func @transform_6(%arg0: i32, %arg1: i32) -> (i32, i32, i32) {
    %c0_i32 = arith.constant 0 : i32
    %c0_i32_0 = arith.constant 0 : i32
    return %arg0, %arg1, %c0_i32 : i32, i32, i32
  }
}

</mosaic_0001>

<llo_original>
// kernel: tpu_custom_call.1
$region0: #{tpu_custom_call.1}
  #allocation0 [shape = 'u32[]', space=smem, size = 0x4, offset = 0x4, fixed_abs, tag = 'smem constant byte address 0x4 - core index']
  #allocation1 [shape = 'u32[144,128]{1,0:T(1,128)}', space=vmem, size = 0x12000, scoped, tag = 'internal scratch']
  %s0 = inlined_call_operand.hbm [shape: f32[2,16,16], index: 0, kind: input, shape index: {}]
  %s1 = inlined_call_operand.hbm [shape: f32[16,256], index: 1, kind: input, shape index: {}]
  %s2 = inlined_call_operand.vmem [shape: f32[1,256], index: 2, kind: input, shape index: {}]
  %s3 = inlined_call_operand.vmem [shape: f32[1,256], index: 3, kind: input, shape index: {}]
  %s4 = inlined_call_operand.vmem [shape: f32[1,256], index: 4, kind: input, shape index: {}]
  %s5 = inlined_call_operand.hbm [shape: f32[16,256], index: 5, kind: input, shape index: {}]
  %s6 = inlined_call_operand.hbm [shape: f32[2,16,256], index: 6, kind: output, shape index: {}]
  %s7 = sld [smem:[#allocation0]]
  $region69: #{tpu_custom_call.1} parent=0
    _
  %s9 = ssub.s32 1, %s7
  %s10 = scalar_select 0, %s9, %s7
  $region1: #{tpu_custom_call.1} parent=0
    #allocation2 [shape = 'u8[16384]{0}', space=vmem, size = 0x4000, scoped, tag = 'input window, operand 0']
    #allocation3 [shape = 's32[2]{0}', space=sflag, size = 0x8, scoped, tag = 'scoped memory for tpu_custom_call.1']
    #allocation4 [shape = 's32[2]{0}', space=sflag, size = 0x8, scoped, tag = 'scoped memory for tpu_custom_call.1']
    #allocation5 [shape = 'u8[16384]{0}', space=vmem, size = 0x4000, scoped, tag = 'input window, operand 1, single buffered']
    #allocation6 [shape = 's32[1]{0}', space=sflag, size = 0x4, scoped, tag = 'scoped memory for tpu_custom_call.1']
    #allocation7 [shape = 'u8[16384]{0}', space=vmem, size = 0x4000, scoped, tag = 'input window, operand 5, single buffered']
    #allocation8 [shape = 'u8[32768]{0}', space=vmem, size = 0x8000, scoped, tag = 'output window, operand 0']
    %11 = vsyncpa [#allocation3], 0
    %s12 = scalar_lea.sflag [#allocation3], 1
    %13 = vsyncpa %s12, 0
    %14 = vsyncpa [#allocation6], 0
    %15 = vsyncpa [#allocation4], 0
    %s16 = scalar_lea.sflag [#allocation4], 1
    %17 = vsyncpa %s16, 0
    loop: start=0, step=1, limit=4
    $region2: #{tpu_custom_call.1} parent=1 // loop_pre_header
      _
    $region3: #{tpu_custom_call.1} parent=1 // loop_header
      %s19 = sphi 0, %s23
      %p20 = scmp.ge.s32.totalorder %s19, 4
      %s26 = sphi 0, %s38
      %s27 = sphi 0, %s34
      %s28 = sphi 0, %s26
      %s29 = sphi 0, %s27
      %s30 = sphi 0, %s28
      %s31 = sphi 0, %s29
      %s43 = sphi 0, %s45
      %s46 = sphi 0, %s43
      %s47 = sphi 0, %s46
      %s63 = sphi 0, %s47
      %s67 = sphi 0, %s67
      %s69 = sphi 0, %s67
      %s70 = sphi 0, %s69
      %s84 = sphi 0, %s70
      %s88 = sphi 0, %s88
      %s90 = sphi 0, %s88
      %s91 = sphi 0, %s90
      %s105 = sphi 0, %s91
      %s109 = sphi 0, %s109
      %s111 = sphi 0, %s109
      %s112 = sphi 0, %s111
      %s126 = sphi 0, %s112
      %s130 = sphi 0, %s130
      %s132 = sphi 0, %s130
      %s133 = sphi 0, %s132
      %s147 = sphi 0, %s133
      %s153 = sphi 0, %s155
      %s156 = sphi 0, %s153
      %s157 = sphi 0, %s156
      %s173 = sphi 0, %s157
      %s181 = sphi 0, %s183
      %s184 = sphi 0, %s181
      %s185 = sphi 0, %s184
      %s201 = sphi 0, %s185
    $region4: #{tpu_custom_call.1} parent=1 // loop_header_branch
      %22 = sbr.rel (%p20) target = $region8
    $region5: #{tpu_custom_call.1} parent=1 // loop_body
      %s24 = ssub.s32 %s19, 1
      %s25 = ssub.s32 %s19, 2
      %s32 = sadd.s32 1, %s27
      %p33 = scmp.ge.s32.totalorder %s32, 1
      %s34 = scalar_select %p33, 0, %s32
      %s35 = sadd.s32 1, %s26
      %s36 = scalar_select %p33, %s35, %s26
      %p37 = scmp.ge.s32.totalorder %s36, 2
      %s38 = scalar_select %p37, 0, %s36
      %s39 = ssub.s32 %s26, %s38
      %s40 = ssub.s32 %s27, %s34
      %s41 = sor.u32 %s39, %s40
      %p42 = scmp.eq.s32.totalorder %s41, 0
      %s44 = sadd.s32 %s43, 1
      %s45 = scalar_select %p42, %s43, %s44
      %p48 = pneg %p42
      %p49 = scmp.eq.s32.totalorder %s19, 1
      %p50 = por %p48, %p49
      %p51 = scmp.ne.s32.totalorder %s43, %s46
      %p52 = scmp.eq.s32.totalorder %s19, 0
      %p53 = por %p51, %p52
      %p54 = scmp.ne.s32.totalorder %s43, %s46
      %p55 = scmp.eq.s32.totalorder %s24, 1
      %p56 = por %p54, %p55
      %p57 = scmp.ne.s32.totalorder %s46, %s47
      %p58 = scmp.eq.s32.totalorder %s24, 0
      %p59 = por %p57, %p58
      %p60 = scmp.ne.s32.totalorder %s46, %s47
      %p61 = scmp.eq.s32.totalorder %s25, 1
      %p62 = por %p60, %p61
      %p64 = scmp.ne.s32.totalorder %s47, %s63
      %p65 = scmp.eq.s32.totalorder %s25, 0
      %p66 = por %p64, %p65
      %s68 = sadd.s32 %s67, 1
      %p71 = scmp.eq.s32.totalorder %s19, 1
      %p72 = scmp.ne.s32.totalorder %s67, %s69
      %p73 = scmp.eq.s32.totalorder %s19, 0
      %p74 = por %p72, %p73
      %p75 = scmp.ne.s32.totalorder %s67, %s69
      %p76 = scmp.eq.s32.totalorder %s24, 1
      %p77 = por %p75, %p76
      %p78 = scmp.ne.s32.totalorder %s69, %s70
      %p79 = scmp.eq.s32.totalorder %s24, 0
      %p80 = por %p78, %p79
      %p81 = scmp.ne.s32.totalorder %s69, %s70
      %p82 = scmp.eq.s32.totalorder %s25, 1
      %p83 = por %p81, %p82
      %p85 = scmp.ne.s32.totalorder %s70, %s84
      %p86 = scmp.eq.s32.totalorder %s25, 0
      %p87 = por %p85, %p86
      %s89 = sadd.s32 %s88, 1
      %p92 = scmp.eq.s32.totalorder %s19, 1
      %p93 = scmp.ne.s32.totalorder %s88, %s90
      %p94 = scmp.eq.s32.totalorder %s19, 0
      %p95 = por %p93, %p94
      %p96 = scmp.ne.s32.totalorder %s88, %s90
      %p97 = scmp.eq.s32.totalorder %s24, 1
      %p98 = por %p96, %p97
      %p99 = scmp.ne.s32.totalorder %s90, %s91
      %p100 = scmp.eq.s32.totalorder %s24, 0
      %p101 = por %p99, %p100
      %p102 = scmp.ne.s32.totalorder %s90, %s91
      %p103 = scmp.eq.s32.totalorder %s25, 1
      %p104 = por %p102, %p103
      %p106 = scmp.ne.s32.totalorder %s91, %s105
      %p107 = scmp.eq.s32.totalorder %s25, 0
      %p108 = por %p106, %p107
      %s110 = sadd.s32 %s109, 1
      %p113 = scmp.eq.s32.totalorder %s19, 1
      %p114 = scmp.ne.s32.totalorder %s109, %s111
      %p115 = scmp.eq.s32.totalorder %s19, 0
      %p116 = por %p114, %p115
      %p117 = scmp.ne.s32.totalorder %s109, %s111
      %p118 = scmp.eq.s32.totalorder %s24, 1
      %p119 = por %p117, %p118
      %p120 = scmp.ne.s32.totalorder %s111, %s112
      %p121 = scmp.eq.s32.totalorder %s24, 0
      %p122 = por %p120, %p121
      %p123 = scmp.ne.s32.totalorder %s111, %s112
      %p124 = scmp.eq.s32.totalorder %s25, 1
      %p125 = por %p123, %p124
      %p127 = scmp.ne.s32.totalorder %s112, %s126
      %p128 = scmp.eq.s32.totalorder %s25, 0
      %p129 = por %p127, %p128
      %s131 = sadd.s32 %s130, 1
      %p134 = scmp.eq.s32.totalorder %s19, 1
      %p135 = scmp.ne.s32.totalorder %s130, %s132
      %p136 = scmp.eq.s32.totalorder %s19, 0
      %p137 = por %p135, %p136
      %p138 = scmp.ne.s32.totalorder %s130, %s132
      %p139 = scmp.eq.s32.totalorder %s24, 1
      %p140 = por %p138, %p139
      %p141 = scmp.ne.s32.totalorder %s132, %s133
      %p142 = scmp.eq.s32.totalorder %s24, 0
      %p143 = por %p141, %p142
      %p144 = scmp.ne.s32.totalorder %s132, %s133
      %p145 = scmp.eq.s32.totalorder %s25, 1
      %p146 = por %p144, %p145
      %p148 = scmp.ne.s32.totalorder %s133, %s147
      %p149 = scmp.eq.s32.totalorder %s25, 0
      %p150 = por %p148, %p149
      %s151 = ssub.s32 %s27, %s34
      %p152 = scmp.eq.s32.totalorder %s151, 0
      %s154 = sadd.s32 %s153, 1
      %s155 = scalar_select %p152, %s153, %s154
      %p158 = pneg %p152
      %p159 = scmp.eq.s32.totalorder %s19, 1
      %p160 = por %p158, %p159
      %p161 = scmp.ne.s32.totalorder %s153, %s156
      %p162 = scmp.eq.s32.totalorder %s19, 0
      %p163 = por %p161, %p162
      %p164 = scmp.ne.s32.totalorder %s153, %s156
      %p165 = scmp.eq.s32.totalorder %s24, 1
      %p166 = por %p164, %p165
      %p167 = scmp.ne.s32.totalorder %s156, %s157
      %p168 = scmp.eq.s32.totalorder %s24, 0
      %p169 = por %p167, %p168
      %p170 = scmp.ne.s32.totalorder %s156, %s157
      %p171 = scmp.eq.s32.totalorder %s25, 1
      %p172 = por %p170, %p171
      %p174 = scmp.ne.s32.totalorder %s157, %s173
      %p175 = scmp.eq.s32.totalorder %s25, 0
      %p176 = por %p174, %p175
      %s177 = ssub.s32 %s26, %s38
      %s178 = ssub.s32 %s27, %s34
      %s179 = sor.u32 %s177, %s178
      %p180 = scmp.eq.s32.totalorder %s179, 0
      %s182 = sadd.s32 %s181, 1
      %s183 = scalar_select %p180, %s181, %s182
      %p186 = pneg %p180
      %p187 = scmp.eq.s32.totalorder %s19, 1
      %p188 = por %p186, %p187
      %p189 = scmp.ne.s32.totalorder %s181, %s184
      %p190 = scmp.eq.s32.totalorder %s19, 0
      %p191 = por %p189, %p190
      %p192 = scmp.ne.s32.totalorder %s181, %s184
      %p193 = scmp.eq.s32.totalorder %s24, 1
      %p194 = por %p192, %p193
      %p195 = scmp.ne.s32.totalorder %s184, %s185
      %p196 = scmp.eq.s32.totalorder %s24, 0
      %p197 = por %p195, %p196
      %p198 = scmp.ne.s32.totalorder %s184, %s185
      %p199 = scmp.eq.s32.totalorder %s25, 1
      %p200 = por %p198, %p199
      %p202 = scmp.ne.s32.totalorder %s185, %s201
      %p203 = scmp.eq.s32.totalorder %s25, 0
      %p204 = por %p202, %p203
      %p205 = scmp.le.s32.totalorder 1, %s19
      %p206 = scmp.lt.s32.totalorder %s19, 3
      %p207 = pnand %p205, %p206
      %p208 = pneg %p207
      // Predicated region
      $region9: #{tpu_custom_call.1} parent=5 // pred_check
        _
      $region10: #{tpu_custom_call.1} parent=5 // pred_check_branch
        %210 = sbr.rel (%p207) target = $region12
      $region11: #{tpu_custom_call.1} parent=5 // pred_region
        %s211 = ssub.s32 %s19, 1
        // Predicated region
        $region13: #{tpu_custom_call.1} parent=11 // pred_check
          %p212 = pneg %p80
        $region14: #{tpu_custom_call.1} parent=11 // pred_check_branch
          %214 = sbr.rel (%p212) target = $region16
        $region15: #{tpu_custom_call.1} parent=11 // pred_region
          %s216 = ssub.s32 512, 512
          %217 = vsyncadd [#allocation6], %s216
          %s218 = sshll.u32 [#allocation5], 4
          %s219 = int_to_ptr.vmem [resolvable:$true] %s218
          %224 = dma.hbm_to_vmem [thread:$0]  %s1, 512, %s219, [#allocation6], 256, 256, 16
        $region16: #{tpu_custom_call.1} parent=11 // pred_fallthru
          _
        // Predicated region
        $region17: #{tpu_custom_call.1} parent=11 // pred_check
          %p225 = pneg %p101
        $region18: #{tpu_custom_call.1} parent=11 // pred_check_branch
          %227 = sbr.rel (%p225) target = $region20
        $region19: #{tpu_custom_call.1} parent=11 // pred_region
          _
        $region20: #{tpu_custom_call.1} parent=11 // pred_fallthru
          _
        // Predicated region
        $region21: #{tpu_custom_call.1} parent=11 // pred_check
          %p228 = pneg %p122
        $region22: #{tpu_custom_call.1} parent=11 // pred_check_branch
          %230 = sbr.rel (%p228) target = $region24
        $region23: #{tpu_custom_call.1} parent=11 // pred_region
          _
        $region24: #{tpu_custom_call.1} parent=11 // pred_fallthru
          _
        // Predicated region
        $region25: #{tpu_custom_call.1} parent=11 // pred_check
          %p231 = pneg %p143
        $region26: #{tpu_custom_call.1} parent=11 // pred_check_branch
          %233 = sbr.rel (%p231) target = $region28
        $region27: #{tpu_custom_call.1} parent=11 // pred_region
          _
        $region28: #{tpu_custom_call.1} parent=11 // pred_fallthru
          _
        // Predicated region
        $region29: #{tpu_custom_call.1} parent=11 // pred_check
          %p234 = pneg %p169
        $region30: #{tpu_custom_call.1} parent=11 // pred_check_branch
          %236 = sbr.rel (%p234) target = $region32
        $region31: #{tpu_custom_call.1} parent=11 // pred_region
          %s237 = smul.u32 2, %s29
          %s239 = ssub.s32 512, 512
          %240 = vsyncadd [#allocation6], %s239
          %s241 = smul.addr %s237, 2
          %s242 = smul.addr %s241, 128
          %s243 = scalar_lea.hbm %s5, %s242
          %s244 = sshll.u32 [#allocation7], 4
          %s245 = int_to_ptr.vmem [resolvable:$true] %s244
          %250 = dma.hbm_to_vmem [thread:$0]  %s243, 512, %s245, [#allocation6], 256, 256, 16
        $region32: #{tpu_custom_call.1} parent=11 // pred_fallthru
          _
      $region12: #{tpu_custom_call.1} parent=5 // pred_fallthru
        _
      %p251 = scmp.lt.s32.totalorder %s19, 2
      // Predicated region
      $region33: #{tpu_custom_call.1} parent=5 // pred_check
        %p252 = pneg %p251
      $region34: #{tpu_custom_call.1} parent=5 // pred_check_branch
        %254 = sbr.rel (%p252) target = $region36
      $region35: #{tpu_custom_call.1} parent=5 // pred_region
        // Predicated region
        $region37: #{tpu_custom_call.1} parent=35 // pred_check
          %p255 = pneg %p53
        $region38: #{tpu_custom_call.1} parent=35 // pred_check_branch
          %257 = sbr.rel (%p255) target = $region40
        $region39: #{tpu_custom_call.1} parent=35 // pred_region
          %s258 = sand.u32 %s43, 1
          %s259 = scalar_lea.sflag [#allocation3], %s258
          %s260 = sand.u32 %s43, 1
          %s261 = smul.addr %s260, 16
          %s262 = scalar_lea.vmem [#allocation2], %s261
          %s263 = smul.u32 2, %s27
          %s265 = ssub.s32 256, 256
          %266 = vsyncadd %s259, %s265
          %s267 = smul.addr %s26, 2
          %s268 = sadd.s32 %s263, %s267
          %s269 = smul.addr %s268, 128
          %s270 = scalar_lea.hbm %s0, %s269
          %s271 = sshll.u32 %s262, 4
          %s272 = int_to_ptr.vmem [resolvable:$true] %s271
          %277 = dma.hbm_to_vmem [thread:$0]  %s270, 256, %s272, %s259, 128, 128, 8
        $region40: #{tpu_custom_call.1} parent=35 // pred_fallthru
          _
      $region36: #{tpu_custom_call.1} parent=5 // pred_fallthru
        _
      %p278 = scmp.le.s32.totalorder 1, %s19
      %p279 = scmp.lt.s32.totalorder %s19, 3
      %p280 = pnand %p278, %p279
      %p281 = pneg %p280
      // Predicated region
      $region41: #{tpu_custom_call.1} parent=5 // pred_check
        _
      $region42: #{tpu_custom_call.1} parent=5 // pred_check_branch
        %283 = sbr.rel (%p280) target = $region44
      $region43: #{tpu_custom_call.1} parent=5 // pred_region
        %s284 = ssub.s32 %s19, 1
        %s285 = sand.u32 %s46, 1
        %s286 = scalar_lea.sflag [#allocation3], %s285
        %s287 = sand.u32 %s46, 1
        %s288 = smul.addr %s287, 16
        %s289 = scalar_lea.vmem [#allocation2], %s288
        // Predicated region
        $region45: #{tpu_custom_call.1} parent=43 // pred_check
          %p290 = pneg %p59
        $region46: #{tpu_custom_call.1} parent=43 // pred_check_branch
          %292 = sbr.rel (%p290) target = $region48
        $region47: #{tpu_custom_call.1} parent=43 // pred_region
          %293 = dma.done %s286, 256
        $region48: #{tpu_custom_call.1} parent=43 // pred_fallthru
          _
        // Predicated region
        $region49: #{tpu_custom_call.1} parent=43 // pred_check
          %p294 = pneg %p80
        $region50: #{tpu_custom_call.1} parent=43 // pred_check_branch
          %296 = sbr.rel (%p294) target = $region52
        $region51: #{tpu_custom_call.1} parent=43 // pred_region
          %297 = dma.done [#allocation6], 512
        $region52: #{tpu_custom_call.1} parent=43 // pred_fallthru
          _
        // Predicated region
        $region53: #{tpu_custom_call.1} parent=43 // pred_check
          %p298 = pneg %p169
        $region54: #{tpu_custom_call.1} parent=43 // pred_check_branch
          %300 = sbr.rel (%p298) target = $region56
        $region55: #{tpu_custom_call.1} parent=43 // pred_region
          %301 = dma.done [#allocation6], 512
        $region56: #{tpu_custom_call.1} parent=43 // pred_fallthru
          _
        %s302 = sand.u32 %s46, 1
        %s303 = scalar_lea.sflag [#allocation3], %s302
        %s304 = sand.u32 %s46, 1
        %s305 = smul.addr %s304, 16
        %s306 = scalar_lea.vmem [#allocation2], %s305
        %p307 = pneg %p59
        %p308 = pneg %p56
        %p309 = pneg %p80
        %p310 = pneg %p77
        %p311 = pneg %p101
        %p312 = pneg %p98
        %p313 = pneg %p122
        %p314 = pneg %p119
        %p315 = pneg %p143
        %p316 = pneg %p140
        %p317 = pneg %p169
        %p318 = pneg %p166
        %p319 = pneg %p197
        %p320 = pneg %p194
        %s321 = sand.u32 %s184, 1
        %s322 = scalar_lea.sflag [#allocation4], %s321
        %s323 = sand.u32 %s184, 1
        %s324 = smul.addr %s323, 32
        %s325 = scalar_lea.vmem [#allocation8], %s324
        %s326 = smul.u32 2, %s29
        %s327 = smul.u32 2, %s29
        %s328 = smul.u32 2, %s29
        %v329 = vld [vmem:[%s289] sm:$0xff]
        %v330 = vld [vmem:[%s289 + $0x8] sm:$0xff]
        %v331 = vld [vmem:[#allocation5] sm:$0xff]
        %v332 = vld [vmem:[#allocation5 + $0x8] sm:$0xff]
        %v333 = vld [vmem:[#allocation5 + $0x10] sm:$0xff]
        %v334 = vld [vmem:[#allocation5 + $0x18] sm:$0xff]
        %v335 = vld [vmem:[%s2] sm:$0x3]
        %v337 = vlaneseq
        %v338 = vshrl.u32 %v337, 7
        %v339 = vsub.s32 0, %v338
        %v340 = vrot.slane %v335, %v339
        %v341 = vlaneseq
        %v342 = vshrl.u32 %v341, 7
        %v343 = vsub.s32 1, %v342
        %v344 = vrot.slane %v335, %v343
        %vm347 = vcmask 130048
        %v349 = vsel %vm347, %v329, 0
        %v352 = vsel %vm347, %v330, 0
        %354 = vmatprep.subr.mxu0 0.0
        %355 = vmatpush1.msra.mxu0 0.0
        %356 = vmatprep.subr.mxu0 0.0
        %357 = vmatpush1.msra.mxu0 0.0
        %358 = vmatprep.subr.mxu0 0.0
        %359 = vmatpush1.msra.mxu0 0.0
        %360 = vmatprep.subr.mxu0 0.0
        %361 = vmatpush1.msra.mxu0 0.0
        %362 = vmatprep.subr.mxu0 0.0
        %363 = vmatpush1.msra.mxu0 0.0
        %364 = vmatprep.subr.mxu0 0.0
        %365 = vmatpush1.msra.mxu0 0.0
        %366 = vmatprep.subr.mxu0 0.0
        %367 = vmatpush1.msra.mxu0 0.0
        %368 = vmatprep.subr.mxu0 0.0
        %369 = vmatpush1.msra.mxu0 0.0
        %370 = vmatprep.subr.mxu0 0.0
        %371 = vmatpush1.msra.mxu0 0.0
        %372 = vmatprep.subr.mxu0 0.0
        %373 = vmatpush1.msra.mxu0 0.0
        %374 = vmatprep.subr.mxu0 0.0
        %375 = vmatpush1.msra.mxu0 0.0
        %376 = vmatprep.subr.mxu0 0.0
        %377 = vmatpush1.msra.mxu0 0.0
        %378 = vmatprep.subr.mxu0 0.0
        %379 = vmatpush1.msra.mxu0 0.0
        %380 = vmatprep.subr.mxu0 0.0
        %381 = vmatpush1.msra.mxu0 0.0
        %382 = vmatprep.subr.mxu0 %v334
        %383 = vmatpush1.msra.mxu0 %v333
        %384 = vmatprep.subr.mxu0 %v332
        %385 = vmatpush1.msra.mxu0 %v331
        %386 = vmatprep.subr.mxu0 0.0
        %387 = vmatpush2.msra.mxu0 0.0
        %388 = vmatprep.subr.mxu0 0.0
        %389 = vmatpush2.msra.mxu0 0.0
        %390 = vmatprep.subr.mxu0 0.0
        %391 = vmatpush2.msra.mxu0 0.0
        %392 = vmatprep.subr.mxu0 0.0
        %393 = vmatpush2.msra.mxu0 0.0
        %394 = vmatprep.subr.mxu0 0.0
        %395 = vmatpush2.msra.mxu0 0.0
        %396 = vmatprep.subr.mxu0 0.0
        %397 = vmatpush2.msra.mxu0 0.0
        %398 = vmatprep.subr.mxu0 0.0
        %399 = vmatpush2.msra.mxu0 0.0
        %400 = vmatprep.subr.mxu0 0.0
        %401 = vmatpush2.msra.mxu0 0.0
        %402 = vmatprep.subr.mxu0 0.0
        %403 = vmatpush2.msra.mxu0 0.0
        %404 = vmatprep.subr.mxu0 0.0
        %405 = vmatpush2.msra.mxu0 0.0
        %406 = vmatprep.subr.mxu0 0.0
        %407 = vmatpush2.msra.mxu0 0.0
        %408 = vmatprep.subr.mxu0 0.0
        %409 = vmatpush2.msra.mxu0 0.0
        %410 = vmatprep.subr.mxu0 0.0
        %411 = vmatpush2.msra.mxu0 0.0
        %412 = vmatprep.subr.mxu0 0.0
        %413 = vmatpush2.msra.mxu0 0.0
        %414 = vmatprep.subr.mxu0 0.0
        %415 = vmatpush2.msra.mxu0 0.0
        %416 = vmatprep.subr.mxu0 0.0
        %417 = vmatpush2.msra.mxu0 0.0
        %418 = vmatprep.mubr.f32.mxu0 0.0
        %419 = vmatmul.mubr.f32.gmra.mxu0 %v349
        %v420 = vpop.f32.mrf.mxu0
        %v421 = vadd.f32 %v340, %v420
        %v422 = vpop.f32.mrf.mxu0
        %v423 = vadd.f32 %v344, %v422
        %424 = vmatprep.mubr.f32.mxu0 0.0
        %425 = vmatmul.mubr.f32.gmra.mxu0 %v352
        %v426 = vpop.f32.mrf.mxu0
        %v427 = vadd.f32 %v340, %v426
        %v428 = vpop.f32.mrf.mxu0
        %v429 = vadd.f32 %v344, %v428
        %430 = vdwg.mxu0
        %v431 = vadd.f32 %v421, %v423
        %432 = vadd.xlane.f32.xlu0 %v431
        %v433 = vpop.xlane.xlu0 %432
        %v434 = vadd.f32 %v427, %v429
        %435 = vadd.xlane.f32.xlu0 %v434
        %v436 = vpop.xlane.xlu0 %435
        %v437 = vrcp.pop 256.0
        %v438 = vmul.f32 %v433, %v437
        %v439 = vmul.f32 %v436, %v437
        %v440 = vmul.f32 %v421, %v421
        %v441 = vmul.f32 %v423, %v423
        %v442 = vmul.f32 %v427, %v427
        %v443 = vmul.f32 %v429, %v429
        %v444 = vadd.f32 %v440, %v441
        %445 = vadd.xlane.f32.xlu0 %v444
        %v446 = vpop.xlane.xlu0 %445
        %v447 = vadd.f32 %v442, %v443
        %448 = vadd.xlane.f32.xlu0 %v447
        %v449 = vpop.xlane.xlu0 %448
        %v450 = vmul.f32 %v446, %v437
        %v451 = vmul.f32 %v449, %v437
        %v452 = vmul.f32 %v438, %v438
        %v453 = vmul.f32 %v439, %v439
        %v454 = vsub.f32 %v450, %v452
        %v455 = vsub.f32 %v451, %v453
        %v456 = vadd.f32 %v454, 1e-05
        %v457 = vadd.f32 %v455, 1e-05
        %v458 = vrsqrt.pop %v456
        %v459 = vrsqrt.pop %v457
        %v460 = vsub.f32 %v421, %v438
        %v461 = vsub.f32 %v423, %v438
        %v462 = vsub.f32 %v427, %v439
        %v463 = vsub.f32 %v429, %v439
        %v464 = vmul.f32 %v460, %v458
        %v465 = vmul.f32 %v461, %v458
        %v466 = vmul.f32 %v462, %v459
        %v467 = vmul.f32 %v463, %v459
        %v468 = vld [vmem:[%s3] sm:$0x3]
        %v470 = vlaneseq
        %v471 = vshrl.u32 %v470, 7
        %v472 = vsub.s32 0, %v471
        %v473 = vrot.slane %v468, %v472
        %v474 = vlaneseq
        %v475 = vshrl.u32 %v474, 7
        %v476 = vsub.s32 1, %v475
        %v477 = vrot.slane %v468, %v476
        %v480 = vmul.f32 %v464, %v473
        %v481 = vmul.f32 %v465, %v477
        %v482 = vmul.f32 %v466, %v473
        %v483 = vmul.f32 %v467, %v477
        %v484 = vld [vmem:[%s4] sm:$0x3]
        %v486 = vlaneseq
        %v487 = vshrl.u32 %v486, 7
        %v488 = vsub.s32 0, %v487
        %v489 = vrot.slane %v484, %v488
        %v490 = vlaneseq
        %v491 = vshrl.u32 %v490, 7
        %v492 = vsub.s32 1, %v491
        %v493 = vrot.slane %v484, %v492
        %v496 = vadd.f32 %v480, %v489
        %v497 = vadd.f32 %v481, %v493
        %v498 = vadd.f32 %v482, %v489
        %v499 = vadd.f32 %v483, %v493
        %v500 = vld [vmem:[#allocation7] sm:$0xff]
        %v501 = vld [vmem:[#allocation7 + $0x8] sm:$0xff]
        %v502 = vld [vmem:[#allocation7 + $0x10] sm:$0xff]
        %v503 = vld [vmem:[#allocation7 + $0x18] sm:$0xff]
        %v504 = vadd.f32 %v496, %v500
        %v505 = vadd.f32 %v497, %v501
        %v506 = vadd.f32 %v498, %v502
        %v507 = vadd.f32 %v499, %v503
        %508 = vst [vmem:[%s325] sm:$0xff] %v504
        %509 = vst [vmem:[%s325 + $0x8] sm:$0xff] %v505
        %510 = vst [vmem:[%s325 + $0x10] sm:$0xff] %v506
        %511 = vst [vmem:[%s325 + $0x18] sm:$0xff] %v507
        %s512 = sand.u32 %s184, 1
        %s513 = scalar_lea.sflag [#allocation4], %s512
        %s514 = sand.u32 %s184, 1
        %s515 = smul.addr %s514, 32
        %s516 = scalar_lea.vmem [#allocation8], %s515
        // Predicated region
        $region57: #{tpu_custom_call.1} parent=43 // pred_check
          %p517 = pneg %p194
        $region58: #{tpu_custom_call.1} parent=43 // pred_check_branch
          %519 = sbr.rel (%p517) target = $region60
        $region59: #{tpu_custom_call.1} parent=43 // pred_region
          %s520 = smul.u32 2, %s29
          %s522 = ssub.s32 512, 512
          %523 = vsyncadd %s513, %s522
          %s524 = smul.addr %s520, 2
          %s525 = smul.addr %s28, 4
          %s526 = sadd.s32 %s524, %s525
          %s527 = smul.addr %s526, 128
          %s528 = scalar_lea.hbm %s6, %s527
          %s529 = sshll.u32 %s516, 4
          %s530 = int_to_ptr.vmem [resolvable:$true] %s529
          %535 = dma.vmem_to_hbm [thread:$0]  %s530, 512, %s528, %s513, 256, 256, 16
        $region60: #{tpu_custom_call.1} parent=43 // pred_fallthru
          _
      $region44: #{tpu_custom_call.1} parent=5 // pred_fallthru
        _
      %p536 = scmp.le.s32.totalorder 2, %s19
      // Predicated region
      $region61: #{tpu_custom_call.1} parent=5 // pred_check
        %p537 = pneg %p536
      $region62: #{tpu_custom_call.1} parent=5 // pred_check_branch
        %539 = sbr.rel (%p537) target = $region64
      $region63: #{tpu_custom_call.1} parent=5 // pred_region
        %s540 = ssub.s32 %s19, 2
        // Predicated region
        $region65: #{tpu_custom_call.1} parent=63 // pred_check
          %p541 = pneg %p200
        $region66: #{tpu_custom_call.1} parent=63 // pred_check_branch
          %543 = sbr.rel (%p541) target = $region68
        $region67: #{tpu_custom_call.1} parent=63 // pred_region
          %s544 = sand.u32 %s185, 1
          %s545 = scalar_lea.sflag [#allocation4], %s544
          %s546 = sand.u32 %s185, 1
          %s547 = smul.addr %s546, 32
          %s548 = scalar_lea.vmem [#allocation8], %s547
          %549 = dma.done %s545, 512
        $region68: #{tpu_custom_call.1} parent=63 // pred_fallthru
          _
      $region64: #{tpu_custom_call.1} parent=5 // pred_fallthru
        _
    $region6: #{tpu_custom_call.1} parent=1 // loop_footer
      %s23 = sadd.s32 1, %s19
    $region7: #{tpu_custom_call.1} parent=1 // loop_footer_branch
      %18 = sbr.rel target = $region3
    $region8: #{tpu_custom_call.1} parent=1 // loop_exit
      _
    %550 = vsyncpa [#allocation3], 1
    %s551 = scalar_lea.sflag [#allocation3], 1
    %552 = vsyncpa %s551, 1
    %553 = vsyncpa [#allocation6], 1
    %554 = vsyncpa [#allocation4], 1
    %s555 = scalar_lea.sflag [#allocation4], 1
    %556 = vsyncpa %s555, 1

</llo_original>
